<compile_context>
chip_gen: v6e
topology: v6e:2x2x1
jax: 0.10.0
libtpu: 0.0.40
codegen_flags: <defaults>
</compile_context>

<pallas_src>
import math
import jax
import jax.numpy as jnp
from jax.experimental import pallas as pl
from jax.experimental.pallas import tpu as pltpu


def _attn_pool_kernel(x_ref, wq_ref, wk_ref, wv_ref, w1_ref, b1_ref, pooled_ref):
    """Fused kernel over TB batch rows:
       QKV projections -> scaled dot-product attention (f32 softmax)
       -> FFN + ReLU -> max-pool over the sequence axis.
       All MXU matmuls use bf16 operands with f32 accumulation.
       Classifier matmul is done once in the wrapper.
    """
    TB, S, E = x_ref.shape
    H = w1_ref.shape[1]
    inv_sqrt_e = 1.0 / math.sqrt(E)

    # Flatten (TB, S) so the token-wise matmuls are one [TB*S, E] @ [E, *].
    x2 = x_ref[...].reshape(TB * S, E)                                 # bf16

    q = jnp.dot(x2, wq_ref[...], preferred_element_type=jnp.float32)  # [TB*S, E]
    k = jnp.dot(x2, wk_ref[...], preferred_element_type=jnp.float32)
    v = jnp.dot(x2, wv_ref[...], preferred_element_type=jnp.float32)

    # Fold the attention scale into Q (cheaper than scaling the [TB,S,S] scores).
    q = q * inv_sqrt_e

    # bf16 operands for the attention matmuls (f32 accumulation on the MXU).
    q3 = q.astype(jnp.bfloat16).reshape(TB, S, E)
    k3 = k.astype(jnp.bfloat16).reshape(TB, S, E)
    v3 = v.astype(jnp.bfloat16).reshape(TB, S, E)

    # scores = (Q / sqrt(E)) K^T: contract last dims of both operands directly
    # (no explicit transpose through the XLU).
    scores = jnp.einsum("bqd,bkd->bqk", q3, k3,
                        preferred_element_type=jnp.float32)            # [TB, S, S]

    # Numerically stable softmax in f32.
    m = jnp.max(scores, axis=-1, keepdims=True)
    p = jnp.exp(scores - m)
    denom = jnp.sum(p, axis=-1, keepdims=True)

    # Un-normalized P @ V (bf16 operands), normalized afterwards with the EUP
    # approx reciprocal.
    attn = jnp.einsum("bqk,bkd->bqd", p.astype(jnp.bfloat16), v3,
                      preferred_element_type=jnp.float32)              # [TB, S, E]
    attn = attn * pl.reciprocal(denom, approx=True)

    # Feed-forward + ReLU (bf16 MXU operands, f32 accumulate).
    ff = jnp.dot(attn.astype(jnp.bfloat16).reshape(TB * S, E), w1_ref[...],
                 preferred_element_type=jnp.float32)                   # [TB*S, H]
    ff = jnp.maximum(ff + b1_ref[...], 0.0)

    # Max over the sequence dim (torch.max(ff, 1)).
    pooled_ref[...] = jnp.max(ff.reshape(TB, S, H), axis=1).astype(pooled_ref.dtype)
    # TODO(synk): Dropout(0.3) omitted — inference/eval semantics (identity).


def simple_self_attention_forward(token_ids, params):
    """token_ids: int32 [B, S]. Returns logits [B, numcls] (float32)."""
    emb_table = params["embedding"]
    # Embedding lookup is glue (data-dependent gather) done in plain JAX.
    # TODO(synk): could be fused via scalar-prefetch + pl.Element row gather
    # once B*S*E is large enough for the extra HBM round-trip to matter.
    x = jnp.take(emb_table, token_ids, axis=0).astype(jnp.float32)     # [B, S, E]
    B, S, E = x.shape
    H = params["w1"].shape[1]

    # Block several batch rows per grid step so TB*S ~ 256 matmul rows
    # (one full MXU tile height on v6e/v7x), amortizing per-step overhead.
    TB = max(1, min(B, int(pl.cdiv(256, S))))
    if TB < B:
        TB = ((TB + 7) // 8) * 8          # keep pooled out-block sublane-aligned
    B_pad = int(pl.cdiv(B, TB)) * TB
    if B_pad > B:
        x = jnp.pad(x, ((0, B_pad - B), (0, 0), (0, 0)))

    # bf16 MXU operands; accumulation stays f32 inside the kernel.
    x_bf = x.astype(jnp.bfloat16)
    wq = params["wq"].astype(jnp.bfloat16)
    wk = params["wk"].astype(jnp.bfloat16)
    wv = params["wv"].astype(jnp.bfloat16)
    w1 = params["w1"].astype(jnp.bfloat16)
    b1 = params["b1"].reshape(1, H).astype(jnp.float32)

    const2d = lambda b: (0, 0)
    grid_spec = pltpu.PrefetchScalarGridSpec(
        num_scalar_prefetch=0,
        grid=(B_pad // TB,),
        in_specs=[
            pl.BlockSpec((TB, S, E), lambda b: (b, 0, 0)),   # x: TB batch rows
            pl.BlockSpec((E, E), const2d),                   # wq
            pl.BlockSpec((E, E), const2d),                   # wk
            pl.BlockSpec((E, E), const2d),                   # wv
            pl.BlockSpec((E, H), const2d),                   # w1
            pl.BlockSpec((1, H), const2d),                   # b1
        ],
        out_specs=pl.BlockSpec((TB, H), lambda b: (b, 0)),
    )

    pooled = pl.pallas_call(
        _attn_pool_kernel,
        out_shape=jax.ShapeDtypeStruct((B_pad, H), jnp.float32),
        grid_spec=grid_spec,
        compiler_params=pltpu.CompilerParams(
            dimension_semantics=("parallel",)),
    )(x_bf, wq, wk, wv, w1, b1)

    pooled = pooled[:B]                                       # drop padded rows
    # Classifier as one well-shaped, lane-dense [B, H] @ [H, C] matmul in XLA.
    return pooled @ params["wc"] + params["bc"]


def init_params(key, vocab_size, embedd_dim, hidden_dim, numcls):
    ks = jax.random.split(key, 7)
    scale = 0.05
    return {
        "embedding": scale * jax.random.normal(ks[0], (vocab_size, embedd_dim), jnp.float32),
        # stored already transposed: [in, out]
        "wq": scale * jax.random.normal(ks[1], (embedd_dim, embedd_dim), jnp.float32),
        "wk": scale * jax.random.normal(ks[2], (embedd_dim, embedd_dim), jnp.float32),
        "wv": scale * jax.random.normal(ks[3], (embedd_dim, embedd_dim), jnp.float32),
        "w1": scale * jax.random.normal(ks[4], (embedd_dim, hidden_dim), jnp.float32),
        "b1": scale * jax.random.normal(ks[5], (hidden_dim,), jnp.float32),
        "wc": scale * jax.random.normal(ks[6], (hidden_dim, numcls), jnp.float32),
        "bc": jnp.zeros((numcls,), jnp.float32),
    }


def _reference(token_ids, params):
    """Pure-JAX f32 reference for sanity checking."""
    x = jnp.take(params["embedding"], token_ids, axis=0)
    q = x @ params["wq"]
    k = x @ params["wk"]
    v = x @ params["wv"]
    scores = jnp.einsum("bqe,bke->bqk", q, k) / math.sqrt(x.shape[-1])
    scores = jax.nn.softmax(scores, axis=-1)
    attn = jnp.einsum("bqk,bke->bqe", scores, v)
    ff = jax.nn.relu(attn @ params["w1"] + params["b1"])
    pooled = jnp.max(ff, axis=1)
    return pooled @ params["wc"] + params["bc"]


if __name__ == "__main__":
    key = jax.random.PRNGKey(0)
    k_param, k_tok = jax.random.split(key)

    vocab_size, embedd_dim, hidden_dim, numcls = 64, 32, 32, 4
    B, S = 2, 8

    params = init_params(k_param, vocab_size, embedd_dim, hidden_dim, numcls)
    token_ids = jax.random.randint(k_tok, (B, S), 0, vocab_size, dtype=jnp.int32)

    out = simple_self_attention_forward(token_ids, params)
    out = jax.block_until_ready(out)

    ref = _reference(token_ids, params)
    assert out.shape == (B, numcls)
    # bf16 MXU operands + approx reciprocal -> loosened tolerance vs f32 reference.
    assert jnp.allclose(out, ref, atol=2e-2, rtol=2e-2), "mismatch vs reference"

    print("KERNEL_OK")
</pallas_src>

<mosaic_0001>
module attributes {stable_mosaic.version = 11 : i64} {
  func.func @_attn_pool_kernel(%arg0: i32, %arg1: memref<2x8x32xbf16, #tpu.memory_space<vmem>>, %arg2: memref<32x32xbf16, #tpu.memory_space<vmem>>, %arg3: memref<32x32xbf16, #tpu.memory_space<vmem>>, %arg4: memref<32x32xbf16, #tpu.memory_space<vmem>>, %arg5: memref<32x32xbf16, #tpu.memory_space<vmem>>, %arg6: memref<1x32xf32, #tpu.memory_space<vmem>>, %arg7: memref<2x32xf32, #tpu.memory_space<vmem>>) attributes {dimension_semantics = [#tpu.dimension_semantics<parallel>], iteration_bounds = array<i64: 1>, scalar_prefetch = 0 : i64, scratch_operands = 0 : i64, tpu.core_type = #tpu.core_type<tc>, window_params = [{transform_indices = @transform_0, window_bounds = array<i64: 2, 8, 32>}, {pipeline_mode = #tpu.pipeline_mode<synchronous>, transform_indices = @transform_1, window_bounds = array<i64: 32, 32>}, {pipeline_mode = #tpu.pipeline_mode<synchronous>, transform_indices = @transform_2, window_bounds = array<i64: 32, 32>}, {pipeline_mode = #tpu.pipeline_mode<synchronous>, transform_indices = @transform_3, window_bounds = array<i64: 32, 32>}, {pipeline_mode = #tpu.pipeline_mode<synchronous>, transform_indices = @transform_4, window_bounds = array<i64: 32, 32>}, {pipeline_mode = #tpu.pipeline_mode<synchronous>, transform_indices = @transform_5, window_bounds = array<i64: 1, 32>}, {transform_indices = @transform_6, window_bounds = array<i64: 2, 32>}]} {
    %c0 = arith.constant 0 : index
    %c0_0 = arith.constant 0 : index
    %c0_1 = arith.constant 0 : index
    %0 = vector.load %arg1[%c0, %c0_0, %c0_1] : memref<2x8x32xbf16, #tpu.memory_space<vmem>>, vector<2x8x32xbf16>
    %1 = vector.shape_cast %0 : vector<2x8x32xbf16> to vector<16x32xbf16>
    %c0_2 = arith.constant 0 : index
    %c0_3 = arith.constant 0 : index
    %2 = vector.load %arg2[%c0_2, %c0_3] : memref<32x32xbf16, #tpu.memory_space<vmem>>, vector<32x32xbf16>
    %cst = arith.constant dense<0.000000e+00> : vector<16x32xf32>
    %3 = tpu.matmul %1, %2, %cst {dimension_numbers = #tpu.dot_dimension_numbers<[1], [0], [0], [1], [0, 0, 1, 1], [], []>} : vector<16x32xbf16>, vector<32x32xbf16>, vector<16x32xf32> -> vector<16x32xf32>
    %c0_4 = arith.constant 0 : index
    %c0_5 = arith.constant 0 : index
    %4 = vector.load %arg3[%c0_4, %c0_5] : memref<32x32xbf16, #tpu.memory_space<vmem>>, vector<32x32xbf16>
    %cst_6 = arith.constant dense<0.000000e+00> : vector<16x32xf32>
    %5 = tpu.matmul %1, %4, %cst_6 {dimension_numbers = #tpu.dot_dimension_numbers<[1], [0], [0], [1], [0, 0, 1, 1], [], []>} : vector<16x32xbf16>, vector<32x32xbf16>, vector<16x32xf32> -> vector<16x32xf32>
    %c0_7 = arith.constant 0 : index
    %c0_8 = arith.constant 0 : index
    %6 = vector.load %arg4[%c0_7, %c0_8] : memref<32x32xbf16, #tpu.memory_space<vmem>>, vector<32x32xbf16>
    %cst_9 = arith.constant dense<0.000000e+00> : vector<16x32xf32>
    %7 = tpu.matmul %1, %6, %cst_9 {dimension_numbers = #tpu.dot_dimension_numbers<[1], [0], [0], [1], [0, 0, 1, 1], [], []>} : vector<16x32xbf16>, vector<32x32xbf16>, vector<16x32xf32> -> vector<16x32xf32>
    %cst_10 = arith.constant 0.176776692 : f32
    %8 = vector.broadcast %cst_10 : f32 to vector<16x32xf32>
    %9 = arith.mulf %3, %8 : vector<16x32xf32>
    %10 = arith.truncf %9 : vector<16x32xf32> to vector<16x32xbf16>
    %11 = vector.shape_cast %10 : vector<16x32xbf16> to vector<2x8x32xbf16>
    %12 = arith.truncf %5 : vector<16x32xf32> to vector<16x32xbf16>
    %13 = vector.shape_cast %12 : vector<16x32xbf16> to vector<2x8x32xbf16>
    %14 = arith.truncf %7 : vector<16x32xf32> to vector<16x32xbf16>
    %15 = vector.shape_cast %14 : vector<16x32xbf16> to vector<2x8x32xbf16>
    "tpu.trace_start"() <{level = 10 : i32, message = "bqd,bkd->bqk"}> : () -> ()
    %cst_11 = arith.constant dense<0.000000e+00> : vector<2x8x8xf32>
    %16 = tpu.matmul %11, %13, %cst_11 {dimension_numbers = #tpu.dot_dimension_numbers<[2], [2], [1], [1], [0, 0, 0, 1, 1, 1], [0], [0]>} : vector<2x8x32xbf16>, vector<2x8x32xbf16>, vector<2x8x8xf32> -> vector<2x8x8xf32>
    "tpu.trace_stop"() : () -> ()
    %cst_12 = arith.constant dense<0xFF800000> : vector<2x8xf32>
    %17 = vector.multi_reduction <maximumf>, %16, %cst_12 [2] : vector<2x8x8xf32> to vector<2x8xf32>
    %18 = vector.shape_cast %17 : vector<2x8xf32> to vector<2x8x1xf32>
    %19 = vector.broadcast %18 : vector<2x8x1xf32> to vector<2x8x8xf32>
    %20 = arith.subf %16, %19 : vector<2x8x8xf32>
    %21 = math.exp %20 : vector<2x8x8xf32>
    %cst_13 = arith.constant dense<0.000000e+00> : vector<2x8xf32>
    %22 = vector.multi_reduction <add>, %21, %cst_13 [2] : vector<2x8x8xf32> to vector<2x8xf32>
    %23 = vector.shape_cast %22 : vector<2x8xf32> to vector<2x8x1xf32>
    %24 = arith.truncf %21 : vector<2x8x8xf32> to vector<2x8x8xbf16>
    "tpu.trace_start"() <{level = 10 : i32, message = "bqk,bkd->bqd"}> : () -> ()
    %cst_14 = arith.constant dense<0.000000e+00> : vector<2x8x32xf32>
    %25 = tpu.matmul %24, %15, %cst_14 {dimension_numbers = #tpu.dot_dimension_numbers<[2], [1], [1], [2], [0, 0, 0, 1, 1, 2], [0], [0]>} : vector<2x8x8xbf16>, vector<2x8x32xbf16>, vector<2x8x32xf32> -> vector<2x8x32xf32>
    "tpu.trace_stop"() : () -> ()
    %26 = tpu.reciprocal %23 {approx = true} : vector<2x8x1xf32> -> vector<2x8x1xf32>
    %27 = vector.broadcast %26 : vector<2x8x1xf32> to vector<2x8x32xf32>
    %28 = arith.mulf %25, %27 : vector<2x8x32xf32>
    %29 = arith.truncf %28 : vector<2x8x32xf32> to vector<2x8x32xbf16>
    %30 = vector.shape_cast %29 : vector<2x8x32xbf16> to vector<16x32xbf16>
    %c0_15 = arith.constant 0 : index
    %c0_16 = arith.constant 0 : index
    %31 = vector.load %arg5[%c0_15, %c0_16] : memref<32x32xbf16, #tpu.memory_space<vmem>>, vector<32x32xbf16>
    %cst_17 = arith.constant dense<0.000000e+00> : vector<16x32xf32>
    %32 = tpu.matmul %30, %31, %cst_17 {dimension_numbers = #tpu.dot_dimension_numbers<[1], [0], [0], [1], [0, 0, 1, 1], [], []>} : vector<16x32xbf16>, vector<32x32xbf16>, vector<16x32xf32> -> vector<16x32xf32>
    %c0_18 = arith.constant 0 : index
    %c0_19 = arith.constant 0 : index
    %33 = vector.load %arg6[%c0_18, %c0_19] : memref<1x32xf32, #tpu.memory_space<vmem>>, vector<1x32xf32>
    %34 = vector.broadcast %33 : vector<1x32xf32> to vector<16x32xf32>
    %35 = arith.addf %32, %34 : vector<16x32xf32>
    %cst_20 = arith.constant 0.000000e+00 : f32
    %36 = vector.broadcast %cst_20 : f32 to vector<16x32xf32>
    %37 = arith.maximumf %35, %36 : vector<16x32xf32>
    %38 = vector.shape_cast %37 : vector<16x32xf32> to vector<2x8x32xf32>
    %cst_21 = arith.constant dense<0xFF800000> : vector<2x32xf32>
    %39 = vector.multi_reduction <maximumf>, %38, %cst_21 [1] : vector<2x8x32xf32> to vector<2x32xf32>
    %c0_22 = arith.constant 0 : index
    %c0_23 = arith.constant 0 : index
    %40 = vector.load %arg7[%c0_22, %c0_23] : memref<2x32xf32, #tpu.memory_space<vmem>>, vector<2x32xf32>
    tpu.vector_store %arg7[%c0_22, %c0_23], %39 {strides = array<i32>} : memref<2x32xf32, #tpu.memory_space<vmem>>, vector<2x32xf32>,
    return
  }
  func.func @transform_0(%arg0: i32) -> (i32, i32, i32) {
    %c0_i32 = arith.constant 0 : i32
    %c0_i32_0 = arith.constant 0 : i32
    %c0_i32_1 = arith.constant 0 : i32
    return %arg0, %c0_i32, %c0_i32_0 : i32, i32, i32
  }
  func.func @transform_1(%arg0: i32) -> (i32, i32) {
    %c0_i32 = arith.constant 0 : i32
    %c0_i32_0 = arith.constant 0 : i32
    %c0_i32_1 = arith.constant 0 : i32
    return %c0_i32, %c0_i32_0 : i32, i32
  }
  func.func @transform_2(%arg0: i32) -> (i32, i32) {
    %c0_i32 = arith.constant 0 : i32
    %c0_i32_0 = arith.constant 0 : i32
    %c0_i32_1 = arith.constant 0 : i32
    return %c0_i32, %c0_i32_0 : i32, i32
  }
  func.func @transform_3(%arg0: i32) -> (i32, i32) {
    %c0_i32 = arith.constant 0 : i32
    %c0_i32_0 = arith.constant 0 : i32
    %c0_i32_1 = arith.constant 0 : i32
    return %c0_i32, %c0_i32_0 : i32, i32
  }
  func.func @transform_4(%arg0: i32) -> (i32, i32) {
    %c0_i32 = arith.constant 0 : i32
    %c0_i32_0 = arith.constant 0 : i32
    %c0_i32_1 = arith.constant 0 : i32
    return %c0_i32, %c0_i32_0 : i32, i32
  }
  func.func @transform_5(%arg0: i32) -> (i32, i32) {
    %c0_i32 = arith.constant 0 : i32
    %c0_i32_0 = arith.constant 0 : i32
    %c0_i32_1 = arith.constant 0 : i32
    return %c0_i32, %c0_i32_0 : i32, i32
  }
  func.func @transform_6(%arg0: i32) -> (i32, i32) {
    %c0_i32 = arith.constant 0 : i32
    %c0_i32_0 = arith.constant 0 : i32
    return %arg0, %c0_i32 : i32, i32
  }
}

</mosaic_0001>

<llo_original>
// kernel: tpu_custom_call.1
$region0: #{tpu_custom_call.1}
  #allocation0 [shape = 'u32[]', space=smem, size = 0x4, offset = 0x4, fixed_abs, tag = 'smem constant byte address 0x4 - core index']
  #allocation1 [shape = 'u32[144,128]{1,0:T(1,128)}', space=vmem, size = 0x12000, scoped, tag = 'internal scratch']
  %s0 = inlined_call_operand.hbm [shape: bf16[2,8,32], index: 0, kind: input, shape index: {}]
  %s1 = inlined_call_operand.hbm [shape: bf16[32,32], index: 1, kind: input, shape index: {}]
  %s2 = inlined_call_operand.hbm [shape: bf16[32,32], index: 2, kind: input, shape index: {}]
  %s3 = inlined_call_operand.hbm [shape: bf16[32,32], index: 3, kind: input, shape index: {}]
  %s4 = inlined_call_operand.hbm [shape: bf16[32,32], index: 4, kind: input, shape index: {}]
  %s5 = inlined_call_operand.vmem [shape: f32[1,32], index: 5, kind: input, shape index: {}]
  %s6 = inlined_call_operand.hbm [shape: f32[2,32], index: 6, kind: output, shape index: {}]
  %s7 = sld [smem:[#allocation0]]
  $region54: #{tpu_custom_call.1} parent=0
    _
  %s9 = ssub.s32 1, %s7
  %s10 = scalar_select 0, %s9, %s7
  $region1: #{tpu_custom_call.1} parent=0
    #allocation2 [shape = 'u8[4096]{0}', space=vmem, size = 0x1000, scoped, tag = 'input window, operand 0, single buffered']
    #allocation3 [shape = 's32[1]{0}', space=sflag, size = 0x4, scoped, tag = 'scoped memory for tpu_custom_call.1']
    #allocation4 [shape = 's32[1]{0}', space=sflag, size = 0x4, scoped, tag = 'scoped memory for tpu_custom_call.1']
    #allocation5 [shape = 'u8[8192]{0}', space=vmem, size = 0x2000, scoped, tag = 'input window, operand 1, single buffered']
    #allocation6 [shape = 's32[1]{0}', space=sflag, size = 0x4, scoped, tag = 'scoped memory for tpu_custom_call.1']
    #allocation7 [shape = 'u8[8192]{0}', space=vmem, size = 0x2000, scoped, tag = 'input window, operand 2, single buffered']
    #allocation8 [shape = 'u8[8192]{0}', space=vmem, size = 0x2000, scoped, tag = 'input window, operand 3, single buffered']
    #allocation9 [shape = 's32[1]{0}', space=sflag, size = 0x4, scoped, tag = 'scoped memory for tpu_custom_call.1']
    #allocation10 [shape = 'u8[8192]{0}', space=vmem, size = 0x2000, scoped, tag = 'input window, operand 4, single buffered']
    #allocation11 [shape = 'u8[1024]{0}', space=vmem, size = 0x400, scoped, tag = 'output window, operand 0, single buffered']
    %11 = vsyncpa [#allocation3], 0
    %12 = vsyncpa [#allocation6], 0
    %13 = vsyncpa [#allocation9], 0
    %14 = vsyncpa [#allocation4], 0
    // Predicated region
    $region2: #{tpu_custom_call.1} parent=1 // pred_check
      _
    $region3: #{tpu_custom_call.1} parent=1 // pred_check_branch
      %16 = sbr.rel (0) target = $region5
    $region4: #{tpu_custom_call.1} parent=1 // pred_region
      %s18 = ssub.s32 128, 128
      %19 = vsyncadd [#allocation3], %s18
      %s20 = sshll.u32 [#allocation2], 4
      %s21 = int_to_ptr.vmem [resolvable:$true] %s20
      %26 = dma.hbm_to_vmem [thread:$0]  %s0, 128, %s21, [#allocation3], 64, 64, 4
    $region5: #{tpu_custom_call.1} parent=1 // pred_fallthru
      _
    // Predicated region
    $region6: #{tpu_custom_call.1} parent=1 // pred_check
      _
    $region7: #{tpu_custom_call.1} parent=1 // pred_check_branch
      %28 = sbr.rel (0) target = $region9
    $region8: #{tpu_custom_call.1} parent=1 // pred_region
      %s30 = ssub.s32 256, 256
      %31 = vsyncadd [#allocation6], %s30
      %s32 = sshll.u32 [#allocation5], 4
      %s33 = int_to_ptr.vmem [resolvable:$true] %s32
      %38 = dma.hbm_to_vmem [thread:$0]  %s1, 256, %s33, [#allocation6], 64, 64, 4
    $region9: #{tpu_custom_call.1} parent=1 // pred_fallthru
      _
    // Predicated region
    $region10: #{tpu_custom_call.1} parent=1 // pred_check
      _
    $region11: #{tpu_custom_call.1} parent=1 // pred_check_branch
      %40 = sbr.rel (0) target = $region13
    $region12: #{tpu_custom_call.1} parent=1 // pred_region
      %s42 = ssub.s32 256, 256
      %43 = vsyncadd [#allocation6], %s42
      %s44 = sshll.u32 [#allocation7], 4
      %s45 = int_to_ptr.vmem [resolvable:$true] %s44
      %50 = dma.hbm_to_vmem [thread:$0]  %s2, 256, %s45, [#allocation6], 64, 64, 4
    $region13: #{tpu_custom_call.1} parent=1 // pred_fallthru
      _
    // Predicated region
    $region14: #{tpu_custom_call.1} parent=1 // pred_check
      _
    $region15: #{tpu_custom_call.1} parent=1 // pred_check_branch
      %52 = sbr.rel (0) target = $region17
    $region16: #{tpu_custom_call.1} parent=1 // pred_region
      %s54 = ssub.s32 256, 256
      %55 = vsyncadd [#allocation9], %s54
      %s56 = sshll.u32 [#allocation8], 4
      %s57 = int_to_ptr.vmem [resolvable:$true] %s56
      %62 = dma.hbm_to_vmem [thread:$0]  %s3, 256, %s57, [#allocation9], 64, 64, 4
    $region17: #{tpu_custom_call.1} parent=1 // pred_fallthru
      _
    // Predicated region
    $region18: #{tpu_custom_call.1} parent=1 // pred_check
      _
    $region19: #{tpu_custom_call.1} parent=1 // pred_check_branch
      %64 = sbr.rel (0) target = $region21
    $region20: #{tpu_custom_call.1} parent=1 // pred_region
      %s66 = ssub.s32 256, 256
      %67 = vsyncadd [#allocation9], %s66
      %s68 = sshll.u32 [#allocation10], 4
      %s69 = int_to_ptr.vmem [resolvable:$true] %s68
      %74 = dma.hbm_to_vmem [thread:$0]  %s4, 256, %s69, [#allocation9], 64, 64, 4
    $region21: #{tpu_custom_call.1} parent=1 // pred_fallthru
      _
    // Predicated region
    $region22: #{tpu_custom_call.1} parent=1 // pred_check
      _
    $region23: #{tpu_custom_call.1} parent=1 // pred_check_branch
      %76 = sbr.rel (0) target = $region25
    $region24: #{tpu_custom_call.1} parent=1 // pred_region
      _
    $region25: #{tpu_custom_call.1} parent=1 // pred_fallthru
      _
    // Predicated region
    $region26: #{tpu_custom_call.1} parent=1 // pred_check
      _
    $region27: #{tpu_custom_call.1} parent=1 // pred_check_branch
      %78 = sbr.rel (0) target = $region29
    $region28: #{tpu_custom_call.1} parent=1 // pred_region
      %79 = dma.done [#allocation3], 128
    $region29: #{tpu_custom_call.1} parent=1 // pred_fallthru
      _
    // Predicated region
    $region30: #{tpu_custom_call.1} parent=1 // pred_check
      _
    $region31: #{tpu_custom_call.1} parent=1 // pred_check_branch
      %81 = sbr.rel (0) target = $region33
    $region32: #{tpu_custom_call.1} parent=1 // pred_region
      %82 = dma.done [#allocation6], 256
    $region33: #{tpu_custom_call.1} parent=1 // pred_fallthru
      _
    // Predicated region
    $region34: #{tpu_custom_call.1} parent=1 // pred_check
      _
    $region35: #{tpu_custom_call.1} parent=1 // pred_check_branch
      %84 = sbr.rel (0) target = $region37
    $region36: #{tpu_custom_call.1} parent=1 // pred_region
      %85 = dma.done [#allocation6], 256
    $region37: #{tpu_custom_call.1} parent=1 // pred_fallthru
      _
    // Predicated region
    $region38: #{tpu_custom_call.1} parent=1 // pred_check
      _
    $region39: #{tpu_custom_call.1} parent=1 // pred_check_branch
      %87 = sbr.rel (0) target = $region41
    $region40: #{tpu_custom_call.1} parent=1 // pred_region
      %88 = dma.done [#allocation9], 256
    $region41: #{tpu_custom_call.1} parent=1 // pred_fallthru
      _
    // Predicated region
    $region42: #{tpu_custom_call.1} parent=1 // pred_check
      _
    $region43: #{tpu_custom_call.1} parent=1 // pred_check_branch
      %90 = sbr.rel (0) target = $region45
    $region44: #{tpu_custom_call.1} parent=1 // pred_region
      %91 = dma.done [#allocation9], 256
    $region45: #{tpu_custom_call.1} parent=1 // pred_fallthru
      _
    %v93 = vld [vmem:[#allocation2] sm:$0xf]
    %v94 = vld [vmem:[#allocation2 + $0x4] sm:$0xf]
    %v95 = vld [vmem:[#allocation5] sm:$0xf]
    %v96 = vld [vmem:[#allocation5 + $0x4] sm:$0xf]
    %v97 = vld [vmem:[#allocation5 + $0x8] sm:$0xf]
    %v98 = vld [vmem:[#allocation5 + $0xc] sm:$0xf]
    %v101 = vunpack.c.l.b16 %v93
    %v102 = vunpack.c.l.b16 %v94
    %v103 = vpack.c.b16 %v102, %v101
    %v108 = vunpack.c.l.b16 %v95
    %v109 = vunpack.c.l.b16 %v96
    %v110 = vunpack.c.l.b16 %v97
    %v111 = vunpack.c.l.b16 %v98
    %v112 = vpack.c.b16 %v109, %v108
    %v113 = vpack.c.b16 %v111, %v110
    %vm116 = vcmask 261120
    %v118 = vsel %vm116, %v103, 0
    %120 = vmatprep.subr.bf16.mxu0 0
    %121 = vmatpush1.bf16.msra.mxu0 0
    %122 = vmatprep.subr.bf16.mxu0 0
    %123 = vmatpush1.bf16.msra.mxu0 0
    %124 = vmatprep.subr.bf16.mxu0 0
    %125 = vmatpush1.bf16.msra.mxu0 0
    %126 = vmatprep.subr.bf16.mxu0 0
    %127 = vmatpush1.bf16.msra.mxu0 0
    %128 = vmatprep.subr.bf16.mxu0 0
    %129 = vmatpush1.bf16.msra.mxu0 0
    %130 = vmatprep.subr.bf16.mxu0 0
    %131 = vmatpush1.bf16.msra.mxu0 0
    %132 = vmatprep.subr.bf16.mxu0 0
    %133 = vmatpush1.bf16.msra.mxu0 %v113
    %134 = vmatprep.subr.bf16.mxu0 0
    %135 = vmatpush1.bf16.msra.mxu0 %v112
    %136 = vmatprep.subr.bf16.mxu0 0
    %137 = vmatpush2.bf16.msra.mxu0 0
    %138 = vmatprep.subr.bf16.mxu0 0
    %139 = vmatpush2.bf16.msra.mxu0 0
    %140 = vmatprep.subr.bf16.mxu0 0
    %141 = vmatpush2.bf16.msra.mxu0 0
    %142 = vmatprep.subr.bf16.mxu0 0
    %143 = vmatpush2.bf16.msra.mxu0 0
    %144 = vmatprep.subr.bf16.mxu0 0
    %145 = vmatpush2.bf16.msra.mxu0 0
    %146 = vmatprep.subr.bf16.mxu0 0
    %147 = vmatpush2.bf16.msra.mxu0 0
    %148 = vmatprep.subr.bf16.mxu0 0
    %149 = vmatpush2.bf16.msra.mxu0 0
    %150 = vmatprep.subr.bf16.mxu0 0
    %151 = vmatpush2.bf16.msra.mxu0 0
    %152 = vmatprep.mubr.bf16.mxu0 0
    %153 = vmatmul.mubr.bf16.gmra.mxu0 %v118
    %v154 = vpop.f32.mrf.mxu0
    %v155 = vadd.f32 0.0, %v154
    %v156 = vpop.f32.mrf.mxu0
    %v157 = vpop.f32.mrf.mxu0
    %v158 = vadd.f32 0.0, %v157
    %v159 = vpop.f32.mrf.mxu0
    %160 = vdwg.mxu0
    %v161 = vld [vmem:[#allocation7] sm:$0xf]
    %v162 = vld [vmem:[#allocation7 + $0x4] sm:$0xf]
    %v163 = vld [vmem:[#allocation7 + $0x8] sm:$0xf]
    %v164 = vld [vmem:[#allocation7 + $0xc] sm:$0xf]
    %v169 = vunpack.c.l.b16 %v161
    %v170 = vunpack.c.l.b16 %v162
    %v171 = vunpack.c.l.b16 %v163
    %v172 = vunpack.c.l.b16 %v164
    %v173 = vpack.c.b16 %v170, %v169
    %v174 = vpack.c.b16 %v172, %v171
    %177 = vmatprep.subr.bf16.mxu0 0
    %178 = vmatpush1.bf16.msra.mxu0 0
    %179 = vmatprep.subr.bf16.mxu0 0
    %180 = vmatpush1.bf16.msra.mxu0 0
    %181 = vmatprep.subr.bf16.mxu0 0
    %182 = vmatpush1.bf16.msra.mxu0 0
    %183 = vmatprep.subr.bf16.mxu0 0
    %184 = vmatpush1.bf16.msra.mxu0 0
    %185 = vmatprep.subr.bf16.mxu0 0
    %186 = vmatpush1.bf16.msra.mxu0 0
    %187 = vmatprep.subr.bf16.mxu0 0
    %188 = vmatpush1.bf16.msra.mxu0 0
    %189 = vmatprep.subr.bf16.mxu0 0
    %190 = vmatpush1.bf16.msra.mxu0 %v174
    %191 = vmatprep.subr.bf16.mxu0 0
    %192 = vmatpush1.bf16.msra.mxu0 %v173
    %193 = vmatprep.subr.bf16.mxu0 0
    %194 = vmatpush2.bf16.msra.mxu0 0
    %195 = vmatprep.subr.bf16.mxu0 0
    %196 = vmatpush2.bf16.msra.mxu0 0
    %197 = vmatprep.subr.bf16.mxu0 0
    %198 = vmatpush2.bf16.msra.mxu0 0
    %199 = vmatprep.subr.bf16.mxu0 0
    %200 = vmatpush2.bf16.msra.mxu0 0
    %201 = vmatprep.subr.bf16.mxu0 0
    %202 = vmatpush2.bf16.msra.mxu0 0
    %203 = vmatprep.subr.bf16.mxu0 0
    %204 = vmatpush2.bf16.msra.mxu0 0
    %205 = vmatprep.subr.bf16.mxu0 0
    %206 = vmatpush2.bf16.msra.mxu0 0
    %207 = vmatprep.subr.bf16.mxu0 0
    %208 = vmatpush2.bf16.msra.mxu0 0
    %209 = vmatprep.mubr.bf16.mxu0 0
    %210 = vmatmul.mubr.bf16.gmra.mxu0 %v118
    %v211 = vpop.f32.mrf.mxu0
    %v212 = vadd.f32 0.0, %v211
    %v213 = vpop.f32.mrf.mxu0
    %v214 = vpop.f32.mrf.mxu0
    %v215 = vadd.f32 0.0, %v214
    %v216 = vpop.f32.mrf.mxu0
    %217 = vdwg.mxu0
    %v218 = vld [vmem:[#allocation8] sm:$0xf]
    %v219 = vld [vmem:[#allocation8 + $0x4] sm:$0xf]
    %v220 = vld [vmem:[#allocation8 + $0x8] sm:$0xf]
    %v221 = vld [vmem:[#allocation8 + $0xc] sm:$0xf]
    %v226 = vunpack.c.l.b16 %v218
    %v227 = vunpack.c.l.b16 %v219
    %v228 = vunpack.c.l.b16 %v220
    %v229 = vunpack.c.l.b16 %v221
    %v230 = vpack.c.b16 %v227, %v226
    %v231 = vpack.c.b16 %v229, %v228
    %234 = vmatprep.subr.bf16.mxu0 0
    %235 = vmatpush1.bf16.msra.mxu0 0
    %236 = vmatprep.subr.bf16.mxu0 0
    %237 = vmatpush1.bf16.msra.mxu0 0
    %238 = vmatprep.subr.bf16.mxu0 0
    %239 = vmatpush1.bf16.msra.mxu0 0
    %240 = vmatprep.subr.bf16.mxu0 0
    %241 = vmatpush1.bf16.msra.mxu0 0
    %242 = vmatprep.subr.bf16.mxu0 0
    %243 = vmatpush1.bf16.msra.mxu0 0
    %244 = vmatprep.subr.bf16.mxu0 0
    %245 = vmatpush1.bf16.msra.mxu0 0
    %246 = vmatprep.subr.bf16.mxu0 0
    %247 = vmatpush1.bf16.msra.mxu0 %v231
    %248 = vmatprep.subr.bf16.mxu0 0
    %249 = vmatpush1.bf16.msra.mxu0 %v230
    %250 = vmatprep.subr.bf16.mxu0 0
    %251 = vmatpush2.bf16.msra.mxu0 0
    %252 = vmatprep.subr.bf16.mxu0 0
    %253 = vmatpush2.bf16.msra.mxu0 0
    %254 = vmatprep.subr.bf16.mxu0 0
    %255 = vmatpush2.bf16.msra.mxu0 0
    %256 = vmatprep.subr.bf16.mxu0 0
    %257 = vmatpush2.bf16.msra.mxu0 0
    %258 = vmatprep.subr.bf16.mxu0 0
    %259 = vmatpush2.bf16.msra.mxu0 0
    %260 = vmatprep.subr.bf16.mxu0 0
    %261 = vmatpush2.bf16.msra.mxu0 0
    %262 = vmatprep.subr.bf16.mxu0 0
    %263 = vmatpush2.bf16.msra.mxu0 0
    %264 = vmatprep.subr.bf16.mxu0 0
    %265 = vmatpush2.bf16.msra.mxu0 0
    %266 = vmatprep.mubr.bf16.mxu0 0
    %267 = vmatmul.mubr.bf16.gmra.mxu0 %v118
    %v268 = vpop.f32.mrf.mxu0
    %v269 = vadd.f32 0.0, %v268
    %v270 = vpop.f32.mrf.mxu0
    %v271 = vpop.f32.mrf.mxu0
    %v272 = vadd.f32 0.0, %v271
    %v273 = vpop.f32.mrf.mxu0
    %274 = vdwg.mxu0
    %v275 = vmul.f32 %v155, 0.17677669
    %v276 = vmul.f32 %v158, 0.17677669
    %v277 = vpack.c.bf16 %v276, %v275
    %v279 = vunpack.c.l.b16 %v277
    %v280 = vunpack.c.h.b16 %v277
    %v281 = vpack.c.b16 %v279, %v279
    %v282 = vpack.c.b16 %v280, %v280
    %v283 = vpack.c.bf16 %v215, %v212
    %v285 = vunpack.c.l.b16 %v283
    %v286 = vunpack.c.h.b16 %v283
    %v287 = vpack.c.b16 %v285, %v285
    %v288 = vpack.c.b16 %v286, %v286
    %v289 = vpack.c.bf16 %v272, %v269
    %v291 = vunpack.c.l.b16 %v289
    %v292 = vunpack.c.h.b16 %v289
    %v293 = vpack.c.b16 %v291, %v291
    %v294 = vpack.c.b16 %v292, %v292
    %v296 = vsel %vm116, %v281, 0
    %v299 = vsel %vm116, %v287, 0
    %301 = vmatprep.subr.bf16.mxu0 0
    %302 = vmatpush1.bf16.xpose.msra.mxu0 0
    %303 = vmatprep.subr.bf16.mxu0 0
    %304 = vmatpush1.bf16.xpose.msra.mxu0 0
    %305 = vmatprep.subr.bf16.mxu0 0
    %306 = vmatpush1.bf16.xpose.msra.mxu0 0
    %307 = vmatprep.subr.bf16.mxu0 0
    %308 = vmatpush1.bf16.xpose.msra.mxu0 0
    %309 = vmatprep.subr.bf16.mxu0 0
    %310 = vmatpush1.bf16.xpose.msra.mxu0 0
    %311 = vmatprep.subr.bf16.mxu0 0
    %312 = vmatpush1.bf16.xpose.msra.mxu0 0
    %313 = vmatprep.subr.bf16.mxu0 0
    %314 = vmatpush1.bf16.xpose.msra.mxu0 0
    %315 = vmatprep.subr.bf16.mxu0 0
    %316 = vmatpush1.bf16.xpose.msra.mxu0 %v299
    %317 = vmatprep.subr.bf16.mxu0 0
    %318 = vmatpush2.bf16.xpose.msra.mxu0 0
    %319 = vmatprep.subr.bf16.mxu0 0
    %320 = vmatpush2.bf16.xpose.msra.mxu0 0
    %321 = vmatprep.subr.bf16.mxu0 0
    %322 = vmatpush2.bf16.xpose.msra.mxu0 0
    %323 = vmatprep.subr.bf16.mxu0 0
    %324 = vmatpush2.bf16.xpose.msra.mxu0 0
    %325 = vmatprep.subr.bf16.mxu0 0
    %326 = vmatpush2.bf16.xpose.msra.mxu0 0
    %327 = vmatprep.subr.bf16.mxu0 0
    %328 = vmatpush2.bf16.xpose.msra.mxu0 0
    %329 = vmatprep.subr.bf16.mxu0 0
    %330 = vmatpush2.bf16.xpose.msra.mxu0 0
    %331 = vmatprep.subr.bf16.mxu0 0
    %332 = vmatpush2.bf16.xpose.msra.mxu0 0
    %333 = vmatprep.mubr.bf16.mxu0 0
    %334 = vmatmul.mubr.bf16.gmra.mxu0 %v296
    %v335 = vpop.f32.mrf.mxu0
    %v336 = vadd.f32 0.0, %v335
    %v337 = vpop.f32.mrf.mxu0
    %v338 = vpop.f32.mrf.mxu0
    %v339 = vpop.f32.mrf.mxu0
    %340 = vdwg.mxu0
    %v342 = vsel %vm116, %v282, 0
    %v345 = vsel %vm116, %v288, 0
    %347 = vmatprep.subr.bf16.mxu0 0
    %348 = vmatpush1.bf16.xpose.msra.mxu0 0
    %349 = vmatprep.subr.bf16.mxu0 0
    %350 = vmatpush1.bf16.xpose.msra.mxu0 0
    %351 = vmatprep.subr.bf16.mxu0 0
    %352 = vmatpush1.bf16.xpose.msra.mxu0 0
    %353 = vmatprep.subr.bf16.mxu0 0
    %354 = vmatpush1.bf16.xpose.msra.mxu0 0
    %355 = vmatprep.subr.bf16.mxu0 0
    %356 = vmatpush1.bf16.xpose.msra.mxu0 0
    %357 = vmatprep.subr.bf16.mxu0 0
    %358 = vmatpush1.bf16.xpose.msra.mxu0 0
    %359 = vmatprep.subr.bf16.mxu0 0
    %360 = vmatpush1.bf16.xpose.msra.mxu0 0
    %361 = vmatprep.subr.bf16.mxu0 0
    %362 = vmatpush1.bf16.xpose.msra.mxu0 %v345
    %363 = vmatprep.subr.bf16.mxu0 0
    %364 = vmatpush2.bf16.xpose.msra.mxu0 0
    %365 = vmatprep.subr.bf16.mxu0 0
    %366 = vmatpush2.bf16.xpose.msra.mxu0 0
    %367 = vmatprep.subr.bf16.mxu0 0
    %368 = vmatpush2.bf16.xpose.msra.mxu0 0
    %369 = vmatprep.subr.bf16.mxu0 0
    %370 = vmatpush2.bf16.xpose.msra.mxu0 0
    %371 = vmatprep.subr.bf16.mxu0 0
    %372 = vmatpush2.bf16.xpose.msra.mxu0 0
    %373 = vmatprep.subr.bf16.mxu0 0
    %374 = vmatpush2.bf16.xpose.msra.mxu0 0
    %375 = vmatprep.subr.bf16.mxu0 0
    %376 = vmatpush2.bf16.xpose.msra.mxu0 0
    %377 = vmatprep.subr.bf16.mxu0 0
    %378 = vmatpush2.bf16.xpose.msra.mxu0 0
    %379 = vmatprep.mubr.bf16.mxu0 0
    %380 = vmatmul.mubr.bf16.gmra.mxu0 %v342
    %v381 = vpop.f32.mrf.mxu0
    %v382 = vadd.f32 0.0, %v381
    %v383 = vpop.f32.mrf.mxu0
    %v384 = vpop.f32.mrf.mxu0
    %v385 = vpop.f32.mrf.mxu0
    %386 = vdwg.mxu0
    %vm387 = vcmask 64512
    %v388 = vsel %vm387, %v336, -inf
    %389 = vmax.xlane.f32.xlu0 %v388
    %v390 = vpop.xlane.xlu0 %389
    %v391 = vsel %vm387, %v382, -inf
    %392 = vmax.xlane.f32.xlu0 %v391
    %v393 = vpop.xlane.xlu0 %392
    %v394 = vsub.f32 %v336, %v390
    %v395 = vsub.f32 %v382, %v393
    %v396 = vmul.f32 %v394, 1.442695
    %v397 = vpow.pop %v396
    %v398 = vmul.f32 %v395, 1.442695
    %v399 = vpow.pop %v398
    %v400 = vsel %vm387, %v397, 0.0
    %401 = vadd.xlane.f32.xlu0 %v400
    %v402 = vpop.xlane.xlu0 %401
    %v403 = vsel %vm387, %v399, 0.0
    %404 = vadd.xlane.f32.xlu0 %v403
    %v405 = vpop.xlane.xlu0 %404
    %v406 = vpack.c.bf16 %v397, %v397
    %v407 = vpack.c.bf16 %v399, %v399
    %v409 = vsel %vm387, %v406, 0
    %vm411 = vcmask 1043456
    %v413 = vsel %vm411, %v293, 0
    %415 = vmatprep.subr.bf16.mxu0 0
    %416 = vmatpush1.bf16.msra.mxu0 0
    %417 = vmatprep.subr.bf16.mxu0 0
    %418 = vmatpush1.bf16.msra.mxu0 0
    %419 = vmatprep.subr.bf16.mxu0 0
    %420 = vmatpush1.bf16.msra.mxu0 0
    %421 = vmatprep.subr.bf16.mxu0 0
    %422 = vmatpush1.bf16.msra.mxu0 0
    %423 = vmatprep.subr.bf16.mxu0 0
    %424 = vmatpush1.bf16.msra.mxu0 0
    %425 = vmatprep.subr.bf16.mxu0 0
    %426 = vmatpush1.bf16.msra.mxu0 0
    %427 = vmatprep.subr.bf16.mxu0 0
    %428 = vmatpush1.bf16.msra.mxu0 0
    %429 = vmatprep.subr.bf16.mxu0 0
    %430 = vmatpush1.bf16.msra.mxu0 %v413
    %431 = vmatprep.subr.bf16.mxu0 0
    %432 = vmatpush2.bf16.msra.mxu0 0
    %433 = vmatprep.subr.bf16.mxu0 0
    %434 = vmatpush2.bf16.msra.mxu0 0
    %435 = vmatprep.subr.bf16.mxu0 0
    %436 = vmatpush2.bf16.msra.mxu0 0
    %437 = vmatprep.subr.bf16.mxu0 0
    %438 = vmatpush2.bf16.msra.mxu0 0
    %439 = vmatprep.subr.bf16.mxu0 0
    %440 = vmatpush2.bf16.msra.mxu0 0
    %441 = vmatprep.subr.bf16.mxu0 0
    %442 = vmatpush2.bf16.msra.mxu0 0
    %443 = vmatprep.subr.bf16.mxu0 0
    %444 = vmatpush2.bf16.msra.mxu0 0
    %445 = vmatprep.subr.bf16.mxu0 0
    %446 = vmatpush2.bf16.msra.mxu0 0
    %447 = vmatprep.mubr.bf16.mxu0 0
    %448 = vmatmul.mubr.bf16.gmra.mxu0 %v409
    %v449 = vpop.f32.mrf.mxu0
    %v450 = vadd.f32 0.0, %v449
    %v451 = vpop.f32.mrf.mxu0
    %v452 = vpop.f32.mrf.mxu0
    %v453 = vpop.f32.mrf.mxu0
    %454 = vdwg.mxu0
    %v456 = vsel %vm387, %v407, 0
    %v459 = vsel %vm411, %v294, 0
    %461 = vmatprep.subr.bf16.mxu0 0
    %462 = vmatpush1.bf16.msra.mxu0 0
    %463 = vmatprep.subr.bf16.mxu0 0
    %464 = vmatpush1.bf16.msra.mxu0 0
    %465 = vmatprep.subr.bf16.mxu0 0
    %466 = vmatpush1.bf16.msra.mxu0 0
    %467 = vmatprep.subr.bf16.mxu0 0
    %468 = vmatpush1.bf16.msra.mxu0 0
    %469 = vmatprep.subr.bf16.mxu0 0
    %470 = vmatpush1.bf16.msra.mxu0 0
    %471 = vmatprep.subr.bf16.mxu0 0
    %472 = vmatpush1.bf16.msra.mxu0 0
    %473 = vmatprep.subr.bf16.mxu0 0
    %474 = vmatpush1.bf16.msra.mxu0 0
    %475 = vmatprep.subr.bf16.mxu0 0
    %476 = vmatpush1.bf16.msra.mxu0 %v459
    %477 = vmatprep.subr.bf16.mxu0 0
    %478 = vmatpush2.bf16.msra.mxu0 0
    %479 = vmatprep.subr.bf16.mxu0 0
    %480 = vmatpush2.bf16.msra.mxu0 0
    %481 = vmatprep.subr.bf16.mxu0 0
    %482 = vmatpush2.bf16.msra.mxu0 0
    %483 = vmatprep.subr.bf16.mxu0 0
    %484 = vmatpush2.bf16.msra.mxu0 0
    %485 = vmatprep.subr.bf16.mxu0 0
    %486 = vmatpush2.bf16.msra.mxu0 0
    %487 = vmatprep.subr.bf16.mxu0 0
    %488 = vmatpush2.bf16.msra.mxu0 0
    %489 = vmatprep.subr.bf16.mxu0 0
    %490 = vmatpush2.bf16.msra.mxu0 0
    %491 = vmatprep.subr.bf16.mxu0 0
    %492 = vmatpush2.bf16.msra.mxu0 0
    %493 = vmatprep.mubr.bf16.mxu0 0
    %494 = vmatmul.mubr.bf16.gmra.mxu0 %v456
    %v495 = vpop.f32.mrf.mxu0
    %v496 = vadd.f32 0.0, %v495
    %v497 = vpop.f32.mrf.mxu0
    %v498 = vpop.f32.mrf.mxu0
    %v499 = vpop.f32.mrf.mxu0
    %500 = vdwg.mxu0
    %v501 = vrcp.pop %v402
    %v502 = vrcp.pop %v405
    %v503 = vmul.f32 %v450, %v501
    %v504 = vmul.f32 %v496, %v502
    %v505 = vpack.c.bf16 %v503, %v503
    %v506 = vpack.c.bf16 %v504, %v504
    %v507 = vld [vmem:[#allocation10] sm:$0xf]
    %v508 = vld [vmem:[#allocation10 + $0x4] sm:$0xf]
    %v509 = vld [vmem:[#allocation10 + $0x8] sm:$0xf]
    %v510 = vld [vmem:[#allocation10 + $0xc] sm:$0xf]
    %v511 = vld [vmem:[%s5] sm:$0x1]
    %v513 = vlaneseq
    %v514 = vshrl.u32 %v513, 7
    %v515 = vsub.s32 0, %v514
    %v516 = vrot.slane %v511, %v515
    %v520 = vunpack.c.l.b16 %v505
    %v521 = vunpack.c.l.b16 %v506
    %v522 = vpack.c.b16 %v521, %v520
    %v527 = vunpack.c.l.b16 %v507
    %v528 = vunpack.c.l.b16 %v508
    %v529 = vunpack.c.l.b16 %v509
    %v530 = vunpack.c.l.b16 %v510
    %v531 = vpack.c.b16 %v528, %v527
    %v532 = vpack.c.b16 %v530, %v529
    %v536 = vsel %vm116, %v522, 0
    %538 = vmatprep.subr.bf16.mxu0 0
    %539 = vmatpush1.bf16.msra.mxu0 0
    %540 = vmatprep.subr.bf16.mxu0 0
    %541 = vmatpush1.bf16.msra.mxu0 0
    %542 = vmatprep.subr.bf16.mxu0 0
    %543 = vmatpush1.bf16.msra.mxu0 0
    %544 = vmatprep.subr.bf16.mxu0 0
    %545 = vmatpush1.bf16.msra.mxu0 0
    %546 = vmatprep.subr.bf16.mxu0 0
    %547 = vmatpush1.bf16.msra.mxu0 0
    %548 = vmatprep.subr.bf16.mxu0 0
    %549 = vmatpush1.bf16.msra.mxu0 0
    %550 = vmatprep.subr.bf16.mxu0 0
    %551 = vmatpush1.bf16.msra.mxu0 %v532
    %552 = vmatprep.subr.bf16.mxu0 0
    %553 = vmatpush1.bf16.msra.mxu0 %v531
    %554 = vmatprep.subr.bf16.mxu0 0
    %555 = vmatpush2.bf16.msra.mxu0 0
    %556 = vmatprep.subr.bf16.mxu0 0
    %557 = vmatpush2.bf16.msra.mxu0 0
    %558 = vmatprep.subr.bf16.mxu0 0
    %559 = vmatpush2.bf16.msra.mxu0 0
    %560 = vmatprep.subr.bf16.mxu0 0
    %561 = vmatpush2.bf16.msra.mxu0 0
    %562 = vmatprep.subr.bf16.mxu0 0
    %563 = vmatpush2.bf16.msra.mxu0 0
    %564 = vmatprep.subr.bf16.mxu0 0
    %565 = vmatpush2.bf16.msra.mxu0 0
    %566 = vmatprep.subr.bf16.mxu0 0
    %567 = vmatpush2.bf16.msra.mxu0 0
    %568 = vmatprep.subr.bf16.mxu0 0
    %569 = vmatpush2.bf16.msra.mxu0 0
    %570 = vmatprep.mubr.bf16.mxu0 0
    %571 = vmatmul.mubr.bf16.gmra.mxu0 %v536
    %v572 = vpop.f32.mrf.mxu0
    %v573 = vadd.f32 %v516, %v572
    %v574 = vpop.f32.mrf.mxu0
    %v575 = vpop.f32.mrf.mxu0
    %v576 = vadd.f32 %v516, %v575
    %v577 = vpop.f32.mrf.mxu0
    %578 = vdwg.mxu0
    %v579 = vmax.f32 %v573, 0.0
    %v580 = vmax.f32 %v576, 0.0
    %v581 = vsel %vm116, %v579, -inf
    %v582 = vrot.slane %v581, 4
    %v583 = vmax.f32 %v581, %v582
    %v584 = vrot.slane %v583, 2
    %v585 = vmax.f32 %v583, %v584
    %v586 = vrot.slane %v585, 1
    %v587 = vmax.f32 %v585, %v586
    %v588 = vsel %vm116, %v580, -inf
    %v589 = vrot.slane %v588, 4
    %v590 = vmax.f32 %v588, %v589
    %v591 = vrot.slane %v590, 2
    %v592 = vmax.f32 %v590, %v591
    %v593 = vrot.slane %v592, 1
    %v594 = vmax.f32 %v592, %v593
    %vm597 = vcmask 1041409
    %v598 = vsel %vm597, %v594, %v587
    %vm600 = vcmask 254976
    %601 = vst.msk [vmem:[#allocation11] sm:$0x3] %vm600, %v598
    // Predicated region
    $region46: #{tpu_custom_call.1} parent=1 // pred_check
      _
    $region47: #{tpu_custom_call.1} parent=1 // pred_check_branch
      %603 = sbr.rel (0) target = $region49
    $region48: #{tpu_custom_call.1} parent=1 // pred_region
      %s605 = ssub.s32 32, 32
      %606 = vsyncadd [#allocation4], %s605
      %s608 = sshll.u32 [#allocation11], 4
      %s609 = int_to_ptr.vmem [resolvable:$true] %s608
      %611 = dma.vmem_to_hbm [thread:$0]  %s609, 32, %s6, [#allocation4]
    $region49: #{tpu_custom_call.1} parent=1 // pred_fallthru
      _
    // Predicated region
    $region50: #{tpu_custom_call.1} parent=1 // pred_check
      _
    $region51: #{tpu_custom_call.1} parent=1 // pred_check_branch
      %613 = sbr.rel (0) target = $region53
    $region52: #{tpu_custom_call.1} parent=1 // pred_region
      %614 = dma.done [#allocation4], 32
    $region53: #{tpu_custom_call.1} parent=1 // pred_fallthru
      _
    %615 = vsyncpa [#allocation3], 1
    %616 = vsyncpa [#allocation6], 1
    %617 = vsyncpa [#allocation9], 1
    %618 = vsyncpa [#allocation4], 1

</llo_original>
